<compile_context>
chip_gen: v5e
topology: v5e:2x2
jax: 0.10.0
libtpu: 0.0.40
codegen_flags: <defaults>
</compile_context>

<pallas_src>
import functools
import math

import jax
import jax.numpy as jnp
from jax.experimental import pallas as pl
from jax.experimental.pallas import tpu as pltpu

DROPOUT = 0.2


def ffn_kernel(seed_ref, x_ref, w1_ref, b1_ref, w2_ref, b2_ref, *rest,
               nk, need_mask, use_onchip_prng, apply_dropout, keep_prob):
    # refs: x (tm, C) f32 | W1 (C, tk) bf16 | b1 (1, tk) f32 | W2 (tk, C) bf16
    #       b2 (1, C) f32 | [mask (tm, C) f32] | out (tm, C) | [acc (tm, C) f32]
    idx = 0
    mask_ref = None
    if need_mask:
        mask_ref = rest[idx]
        idx += 1
    o_ref = rest[idx]
    idx += 1
    acc_ref = rest[idx] if nk > 1 else None

    # In-kernel bf16 cast (cheap VPU op hidden under MXU/DMA) instead of a
    # separate wrapper-side HBM cast pass over x.
    x = x_ref[...].astype(w1_ref.dtype)
    h = jnp.dot(x, w1_ref[...], preferred_element_type=jnp.float32)
    h = jnp.maximum(h + b1_ref[...], 0.0)                       # bias1 + ReLU
    y = jnp.dot(h.astype(w2_ref.dtype), w2_ref[...],
                preferred_element_type=jnp.float32)

    def finalize(acc):
        out = acc + b2_ref[...]
        if apply_dropout:
            if use_onchip_prng:
                # Inverted dropout via the on-chip PRNG, deterministic per
                # (seed, row-tile).  NOTE: realized mask depends on tm.
                # TODO(synk): dropout RNG is not bit-matched to torch.nn.Dropout.
                pltpu.prng_seed(seed_ref[0] + pl.program_id(0))
                bits = pltpu.prng_random_bits(out.shape)
                if bits.dtype != jnp.uint32:
                    bits = pltpu.bitcast(bits, jnp.uint32)
                thresh = jnp.uint32(min(int(keep_prob * (2 ** 32)), 2 ** 32 - 1))
                out = jnp.where(bits < thresh, out, 0.0) * (1.0 / keep_prob)
            else:
                out = out * mask_ref[...]     # precomputed keep/keep_prob mask
        o_ref[...] = out.astype(o_ref.dtype)

    if nk == 1:
        # Whole H resident: straight-line path, no accumulator traffic.
        finalize(y)
    else:
        # H-streaming: accumulate the second matmul over hidden chunks.
        k = pl.program_id(1)

        @pl.when(k == 0)
        def _():
            acc_ref[...] = jnp.zeros_like(acc_ref)

        acc_ref[...] += y

        @pl.when(k == nk - 1)
        def _():
            finalize(acc_ref[...])


def _round_up(a, b):
    return ((a + b - 1) // b) * b


def _device_vmem_bytes():
    """Per-core VMEM capacity; conservative (v7x, 64 MiB) fallback on failure."""
    try:
        return int(pltpu.get_tpu_info().vmem_capacity_bytes)
    except Exception:
        return 64 * 1024 * 1024


def _choose_tiles(M, C, H, *, need_mask, vmem_cap):
    """Pick (tm, tk) from the device VMEM budget (weights, tiles and the
    (tm, tk) hidden intermediate all accounted for)."""
    budget = int(0.80 * vmem_cap)

    def weight_bytes(tk):
        # double-buffered bf16 W1 (C, tk) + W2 (tk, C) blocks + f32 biases
        return 2 * (C * tk * 2 + tk * C * 2) + 2 * (H + C) * 4

    # --- tk: keep the full H resident when it fits, otherwise stream chunks.
    if weight_bytes(H) <= 0.45 * budget:
        tk = H
    else:
        tk_cap = max(int(0.45 * budget) // (8 * C), 128)   # ~8*C bytes per tk unit
        tk = 0
        t = (min(tk_cap, H) // 128) * 128
        while t >= 128:                 # must divide H exactly (reduction axis)
            if H % t == 0:
                tk = t
                break
            t -= 128
        if tk == 0:
            # TODO(synk): H not a multiple of 128 -> no exact K split; fall back
            # to whole-H residency (may exceed budget for very large H).
            tk = H
    nk = H // tk if H % tk == 0 else 1

    # --- tm: budget rows against what is left after the weight blocks.
    per_row = 2 * C * 4 + 2 * C * 4             # x + out tiles, double-buffered
    if need_mask:
        per_row += 2 * C * 4
    per_row += tk * 6                           # (tm, tk) hidden: f32 + bf16
    if nk > 1:
        per_row += C * 4                        # f32 accumulator scratch

    tm_max = max((budget - weight_bytes(tk)) // per_row, 8)
    if M <= 512:
        # Tiny M: single grid step -- nothing to pipeline against resident
        # weights, and each extra step costs ~0.35 us fixed overhead.
        tm = max(min(_round_up(M, 8), (tm_max // 8) * 8), 8)
    else:
        cap = min(tm_max, 1024, M)
        if cap >= 256:
            tm = (cap // 256) * 256             # MXU-friendly (also 128-aligned)
        elif cap >= 128:
            tm = 128
        else:
            tm = max((cap // 8) * 8, 8)
    return tm, tk


def feed_forward(x, w1, b1, w2, b2, *, seed=0, training=False, tm=None, tk=None):
    """x: (B, T, C).  w1: (C, 4C), b1: (4C,), w2: (4C, C), b2: (C,)."""
    B, T, C = x.shape
    H = w1.shape[-1]
    M = B * T

    x2 = x.reshape(M, C)                        # no cast here: cast is in-kernel

    # bf16 MXU weight operands; callers should keep bf16 master copies so this
    # is a no-op per call (hoisted weight casts).
    w1b = w1 if w1.dtype == jnp.bfloat16 else w1.astype(jnp.bfloat16)
    w2b = w2 if w2.dtype == jnp.bfloat16 else w2.astype(jnp.bfloat16)
    b1f = b1.reshape(1, H).astype(jnp.float32)
    b2f = b2.reshape(1, C).astype(jnp.float32)
    # TODO(synk): optional fp8(e4m3) weight path for v7x (opt-in, changes numerics).

    keep_prob = 1.0 - DROPOUT
    apply_dropout = training and keep_prob < 1.0
    use_onchip_prng = jax.default_backend() == "tpu"
    need_mask = apply_dropout and not use_onchip_prng

    vmem_cap = _device_vmem_bytes()
    tm_auto, tk_auto = _choose_tiles(M, C, H, need_mask=need_mask,
                                     vmem_cap=vmem_cap)
    tm = tm_auto if tm is None else max(8, _round_up(tm, 8))
    tk = tk_auto if tk is None else tk
    if tk != H:
        assert H % tk == 0 and tk % 128 == 0, \
            "tk must divide H and be a multiple of 128"
    nk = H // tk
    # Ragged last row-tile is fine: Pallas masks out-of-bounds stores and padded
    # input rows only feed dropped output rows (row-independent FFN).
    grid = (pl.cdiv(M, tm), nk)

    in_specs = [
        pl.BlockSpec((tm, C), lambda i, k, s: (i, 0)),   # x tile (streamed, f32)
        pl.BlockSpec((C, tk), lambda i, k, s: (0, k)),   # W1 chunk
        pl.BlockSpec((1, tk), lambda i, k, s: (0, k)),   # b1 chunk
        pl.BlockSpec((tk, C), lambda i, k, s: (k, 0)),   # W2 chunk
        pl.BlockSpec((1, C), lambda i, k, s: (0, 0)),    # b2
    ]
    args = [x2, w1b, b1f, w2b, b2f]
    if need_mask:
        # Portable dropout (non-TPU backends): precomputed inverted-dropout mask.
        keep = jax.random.bernoulli(jax.random.PRNGKey(seed), keep_prob, (M, C))
        args.append(keep.astype(jnp.float32) * (1.0 / keep_prob))
        in_specs.append(pl.BlockSpec((tm, C), lambda i, k, s: (i, 0)))

    scratch_shapes = []
    if nk > 1:
        scratch_shapes.append(pltpu.VMEM((tm, C), jnp.float32))

    kern = functools.partial(
        ffn_kernel, nk=nk, need_mask=need_mask,
        use_onchip_prng=use_onchip_prng, apply_dropout=apply_dropout,
        keep_prob=keep_prob)

    # VMEM accounting with a device-aware cap (v7x: 64 MiB per TensorCore).
    est = (2 * (C * tk * 2 + tk * C * 2) + 2 * (H + C) * 4
           + 2 * tm * C * 4 + 2 * tm * C * 4
           + (2 * tm * C * 4 if need_mask else 0)
           + tm * tk * 6
           + (tm * C * 4 if nk > 1 else 0))
    vmem_limit = min(int(0.9 * vmem_cap), max(int(1.4 * est), 32 * 1024 * 1024))
    # TODO(synk): single-buffer the constant-index weight blocks
    # (pipeline_mode=pl.Buffered(1)) once that is plumbed through pallas_call.

    flops = 4 * M * C * H                        # two matmuls (mul + add)
    bytes_accessed = (M * C * 4 + M * C * 4      # x in (f32) + out
                      + 2 * C * H * 2 + (H + C) * 4
                      + (M * C * 4 if need_mask else 0))

    out = pl.pallas_call(
        kern,
        out_shape=jax.ShapeDtypeStruct((M, C), x.dtype),
        grid_spec=pltpu.PrefetchScalarGridSpec(
            num_scalar_prefetch=1,               # seed lands in SMEM
            grid=grid,
            in_specs=in_specs,
            out_specs=pl.BlockSpec((tm, C), lambda i, k, s: (i, 0)),
            scratch_shapes=scratch_shapes,
        ),
        compiler_params=pltpu.CompilerParams(
            dimension_semantics=("parallel", "arbitrary"),
            vmem_limit_bytes=vmem_limit),
        cost_estimate=pl.CostEstimate(flops=flops, transcendentals=0,
                                      bytes_accessed=bytes_accessed),
    )(jnp.array([seed], dtype=jnp.int32), *args)

    return out.reshape(B, T, C)


if __name__ == "__main__":
    key = jax.random.PRNGKey(0)
    B, T, n_embed = 2, 32, 128                  # C multiple of 128 -> lane-dense
    H = 4 * n_embed

    k_x, k_w1, k_b1, k_w2, k_b2 = jax.random.split(key, 5)

    # PyTorch nn.Linear-style init: U(-1/sqrt(fan_in), 1/sqrt(fan_in)).
    bound1 = 1.0 / math.sqrt(n_embed)
    bound2 = 1.0 / math.sqrt(H)
    w1 = jax.random.uniform(k_w1, (n_embed, H), jnp.float32, -bound1, bound1)
    b1 = jax.random.uniform(k_b1, (H,), jnp.float32, -bound1, bound1)
    w2 = jax.random.uniform(k_w2, (H, n_embed), jnp.float32, -bound2, bound2)
    b2 = jax.random.uniform(k_b2, (n_embed,), jnp.float32, -bound2, bound2)

    x = jax.random.normal(k_x, (B, T, n_embed), jnp.float32)

    # bf16 master weight copies, cast once (no per-call weight-cast HBM pass).
    w1b = w1.astype(jnp.bfloat16)
    w2b = w2.astype(jnp.bfloat16)

    # Eval mode (dropout = identity): compare against a same-precision
    # (bf16 matmul, f32 accumulate) pure-JAX reference.
    out = jax.block_until_ready(feed_forward(x, w1b, b1, w2b, b2, training=False))

    xb = x.reshape(-1, n_embed).astype(jnp.bfloat16)
    hh = jnp.maximum(jnp.dot(xb, w1b, preferred_element_type=jnp.float32)
                     + b1.reshape(1, -1), 0.0)
    ref = (jnp.dot(hh.astype(jnp.bfloat16), w2b,
                   preferred_element_type=jnp.float32)
           + b2.reshape(1, -1)).reshape(B, T, n_embed)

    assert out.shape == (B, T, n_embed)
    assert out.dtype == x.dtype
    assert jnp.allclose(out, ref, atol=2e-2, rtol=2e-2), "mismatch vs reference"

    # Exercise the H-streaming (K-accumulation) path in eval mode.
    out_ks = jax.block_until_ready(
        feed_forward(x, w1b, b1, w2b, b2, training=False, tk=128))
    assert jnp.allclose(out_ks, ref, atol=2e-2, rtol=2e-2), "K-stream mismatch"

    # Exercise the training (dropout) path with a multi-step M grid.
    out_train = jax.block_until_ready(
        feed_forward(x, w1b, b1, w2b, b2, seed=123, training=True, tm=32))
    assert out_train.shape == (B, T, n_embed)
    assert bool(jnp.all(jnp.isfinite(out_train)))

    print("KERNEL_OK")
</pallas_src>

<mosaic_0001>
module attributes {stable_mosaic.version = 11 : i64} {
  func.func @ffn_kernel(%arg0: i32, %arg1: i32, %arg2: memref<1xi32, #tpu.memory_space<smem>>, %arg3: memref<64x128xf32, #tpu.memory_space<vmem>>, %arg4: memref<128x512xbf16, #tpu.memory_space<vmem>>, %arg5: memref<1x512xf32, #tpu.memory_space<vmem>>, %arg6: memref<512x128xbf16, #tpu.memory_space<vmem>>, %arg7: memref<1x128xf32, #tpu.memory_space<vmem>>, %arg8: memref<64x128xf32, #tpu.memory_space<vmem>>) attributes {dimension_semantics = [#tpu.dimension_semantics<parallel>, #tpu.dimension_semantics<arbitrary>], iteration_bounds = array<i64: 1, 1>, scalar_prefetch = 1 : i64, scratch_operands = 0 : i64, tpu.core_type = #tpu.core_type<tc>, window_params = [{transform_indices = @transform_0, window_bounds = array<i64: 64, 128>}, {transform_indices = @transform_1, window_bounds = array<i64: 128, 512>}, {transform_indices = @transform_2, window_bounds = array<i64: 1, 512>}, {transform_indices = @transform_3, window_bounds = array<i64: 512, 128>}, {pipeline_mode = #tpu.pipeline_mode<synchronous>, transform_indices = @transform_4, window_bounds = array<i64: 1, 128>}, {transform_indices = @transform_5, window_bounds = array<i64: 64, 128>}]} {
    %c0 = arith.constant 0 : index
    %c0_0 = arith.constant 0 : index
    %0 = vector.load %arg3[%c0, %c0_0] : memref<64x128xf32, #tpu.memory_space<vmem>>, vector<64x128xf32>
    %1 = arith.truncf %0 : vector<64x128xf32> to vector<64x128xbf16>
    %c0_1 = arith.constant 0 : index
    %c0_2 = arith.constant 0 : index
    %2 = vector.load %arg4[%c0_1, %c0_2] : memref<128x512xbf16, #tpu.memory_space<vmem>>, vector<128x512xbf16>
    %cst = arith.constant dense<0.000000e+00> : vector<64x512xf32>
    %3 = tpu.matmul %1, %2, %cst {dimension_numbers = #tpu.dot_dimension_numbers<[1], [0], [0], [1], [0, 0, 1, 1], [], []>} : vector<64x128xbf16>, vector<128x512xbf16>, vector<64x512xf32> -> vector<64x512xf32>
    %c0_3 = arith.constant 0 : index
    %c0_4 = arith.constant 0 : index
    %4 = vector.load %arg5[%c0_3, %c0_4] : memref<1x512xf32, #tpu.memory_space<vmem>>, vector<1x512xf32>
    %5 = vector.broadcast %4 : vector<1x512xf32> to vector<64x512xf32>
    %6 = arith.addf %3, %5 : vector<64x512xf32>
    %cst_5 = arith.constant 0.000000e+00 : f32
    %7 = vector.broadcast %cst_5 : f32 to vector<64x512xf32>
    %8 = arith.maximumf %6, %7 : vector<64x512xf32>
    %9 = arith.truncf %8 : vector<64x512xf32> to vector<64x512xbf16>
    %c0_6 = arith.constant 0 : index
    %c0_7 = arith.constant 0 : index
    %10 = vector.load %arg6[%c0_6, %c0_7] : memref<512x128xbf16, #tpu.memory_space<vmem>>, vector<512x128xbf16>
    %cst_8 = arith.constant dense<0.000000e+00> : vector<64x128xf32>
    %11 = tpu.matmul %9, %10, %cst_8 {dimension_numbers = #tpu.dot_dimension_numbers<[1], [0], [0], [1], [0, 0, 1, 1], [], []>} : vector<64x512xbf16>, vector<512x128xbf16>, vector<64x128xf32> -> vector<64x128xf32>
    %c0_9 = arith.constant 0 : index
    %c0_10 = arith.constant 0 : index
    %12 = vector.load %arg7[%c0_9, %c0_10] : memref<1x128xf32, #tpu.memory_space<vmem>>, vector<1x128xf32>
    %13 = vector.broadcast %12 : vector<1x128xf32> to vector<64x128xf32>
    %14 = arith.addf %11, %13 : vector<64x128xf32>
    %c0_11 = arith.constant 0 : index
    %c0_12 = arith.constant 0 : index
    %15 = vector.load %arg8[%c0_11, %c0_12] : memref<64x128xf32, #tpu.memory_space<vmem>>, vector<64x128xf32>
    tpu.vector_store %arg8[%c0_11, %c0_12], %14 {strides = array<i32>} : memref<64x128xf32, #tpu.memory_space<vmem>>, vector<64x128xf32>,
    return
  }
  func.func @transform_0(%arg0: i32, %arg1: i32, %arg2: memref<1xi32, #tpu.memory_space<smem>>) -> (i32, i32) {
    %c0_i32 = arith.constant 0 : i32
    %c0_i32_0 = arith.constant 0 : i32
    return %arg0, %c0_i32 : i32, i32
  }
  func.func @transform_1(%arg0: i32, %arg1: i32, %arg2: memref<1xi32, #tpu.memory_space<smem>>) -> (i32, i32) {
    %c0_i32 = arith.constant 0 : i32
    %c0_i32_0 = arith.constant 0 : i32
    return %c0_i32, %arg1 : i32, i32
  }
  func.func @transform_2(%arg0: i32, %arg1: i32, %arg2: memref<1xi32, #tpu.memory_space<smem>>) -> (i32, i32) {
    %c0_i32 = arith.constant 0 : i32
    %c0_i32_0 = arith.constant 0 : i32
    return %c0_i32, %arg1 : i32, i32
  }
  func.func @transform_3(%arg0: i32, %arg1: i32, %arg2: memref<1xi32, #tpu.memory_space<smem>>) -> (i32, i32) {
    %c0_i32 = arith.constant 0 : i32
    %c0_i32_0 = arith.constant 0 : i32
    return %arg1, %c0_i32 : i32, i32
  }
  func.func @transform_4(%arg0: i32, %arg1: i32, %arg2: memref<1xi32, #tpu.memory_space<smem>>) -> (i32, i32) {
    %c0_i32 = arith.constant 0 : i32
    %c0_i32_0 = arith.constant 0 : i32
    %c0_i32_1 = arith.constant 0 : i32
    return %c0_i32, %c0_i32_0 : i32, i32
  }
  func.func @transform_5(%arg0: i32, %arg1: i32, %arg2: memref<1xi32, #tpu.memory_space<smem>>) -> (i32, i32) {
    %c0_i32 = arith.constant 0 : i32
    %c0_i32_0 = arith.constant 0 : i32
    return %arg0, %c0_i32 : i32, i32
  }
}

</mosaic_0001>

<llo_original>
// kernel: tpu_custom_call.1
$region0: #{tpu_custom_call.1}
  #allocation0 [shape = 'u32[]', space=smem, size = 0x4, offset = 0x4, fixed_abs, tag = 'smem constant byte address 0x4 - core index']
  #allocation1 [shape = 'u32[72,128]{1,0:T(1,128)}', space=vmem, size = 0x9000, scoped, tag = 'internal scratch']
  #allocation2 [shape = 's32[1]{0}', space=sflag, size = 0x4, scoped, tag = 'scoped memory for tpu_custom_call.1']
  #allocation3 [shape = 's32[1]{0:T(128)S(6)}', space=smem, size = 0x200, scoped, tag = 'prefetched SMEM operand 0']
  %s0 = inlined_call_operand.<no memory space> [shape: s32[1], index: 0, kind: input, shape index: {}]
  %s1 = inlined_call_operand.hbm [shape: f32[64,128], index: 1, kind: input, shape index: {}]
  %s2 = inlined_call_operand.hbm [shape: bf16[128,512], index: 2, kind: input, shape index: {}]
  %s3 = inlined_call_operand.hbm [shape: f32[1,512], index: 3, kind: input, shape index: {}]
  %s4 = inlined_call_operand.hbm [shape: bf16[512,128], index: 4, kind: input, shape index: {}]
  %s5 = inlined_call_operand.vmem [shape: f32[1,128], index: 5, kind: input, shape index: {}]
  %s6 = inlined_call_operand.hbm [shape: f32[64,128], index: 6, kind: output, shape index: {}]
  %s7 = sld [smem:[#allocation0]]
  $region46: #{tpu_custom_call.1} parent=0
    _
  %s9 = ssub.s32 1, %s7
  %s10 = scalar_select 0, %s9, %s7
  %11 = sst [smem:[#allocation3]] %s0
  $region1: #{tpu_custom_call.1} parent=0
    #allocation4 [shape = 'u8[32768]{0}', space=vmem, size = 0x8000, scoped, tag = 'input window, operand 1, single buffered']
    #allocation5 [shape = 's32[1]{0}', space=sflag, size = 0x4, scoped, tag = 'scoped memory for tpu_custom_call.1']
    #allocation6 [shape = 's32[1]{0}', space=sflag, size = 0x4, scoped, tag = 'scoped memory for tpu_custom_call.1']
    #allocation7 [shape = 'u8[131072]{0}', space=vmem, size = 0x20000, scoped, tag = 'input window, operand 2, single buffered']
    #allocation8 [shape = 's32[1]{0}', space=sflag, size = 0x4, scoped, tag = 'scoped memory for tpu_custom_call.1']
    #allocation9 [shape = 'u8[2048]{0}', space=vmem, size = 0x800, scoped, tag = 'input window, operand 3, single buffered']
    #allocation10 [shape = 'u8[131072]{0}', space=vmem, size = 0x20000, scoped, tag = 'input window, operand 4, single buffered']
    #allocation11 [shape = 's32[1]{0}', space=sflag, size = 0x4, scoped, tag = 'scoped memory for tpu_custom_call.1']
    #allocation12 [shape = 'u8[32768]{0}', space=vmem, size = 0x8000, scoped, tag = 'output window, operand 0, single buffered']
    %12 = vsyncpa [#allocation5], 0
    %13 = vsyncpa [#allocation8], 0
    %14 = vsyncpa [#allocation11], 0
    %15 = vsyncpa [#allocation6], 0
    // Predicated region
    $region2: #{tpu_custom_call.1} parent=1 // pred_check
      _
    $region3: #{tpu_custom_call.1} parent=1 // pred_check_branch
      %17 = sbr.rel (0) target = $region5
    $region4: #{tpu_custom_call.1} parent=1 // pred_region
      %19 = vsyncadd [#allocation5], 0
      %s20 = sshll.u32 %s1, 4
      %s21 = int_to_ptr.hbm [resolvable:$true] %s20
      %s22 = sshll.u32 [#allocation4], 4
      %s23 = int_to_ptr.vmem [resolvable:$true] %s22
      %28 = dma.hbm_to_vmem [thread:$0]  %s21, 1024, %s23, [#allocation5], 128, 128, 8
    $region5: #{tpu_custom_call.1} parent=1 // pred_fallthru
      _
    // Predicated region
    $region6: #{tpu_custom_call.1} parent=1 // pred_check
      _
    $region7: #{tpu_custom_call.1} parent=1 // pred_check_branch
      %30 = sbr.rel (0) target = $region9
    $region8: #{tpu_custom_call.1} parent=1 // pred_region
      %32 = vsyncadd [#allocation8], 0
      %s33 = sshll.u32 %s2, 4
      %s34 = int_to_ptr.hbm [resolvable:$true] %s33
      %s35 = sshll.u32 [#allocation7], 4
      %s36 = int_to_ptr.vmem [resolvable:$true] %s35
      %41 = dma.hbm_to_vmem [thread:$0]  %s34, 4096, %s36, [#allocation8], 256, 256, 16
    $region9: #{tpu_custom_call.1} parent=1 // pred_fallthru
      _
    // Predicated region
    $region10: #{tpu_custom_call.1} parent=1 // pred_check
      _
    $region11: #{tpu_custom_call.1} parent=1 // pred_check_branch
      %43 = sbr.rel (0) target = $region13
    $region12: #{tpu_custom_call.1} parent=1 // pred_region
      %45 = vsyncadd [#allocation8], 0
      %s47 = sshll.u32 %s3, 4
      %s48 = int_to_ptr.hbm [resolvable:$true] %s47
      %s49 = sshll.u32 [#allocation9], 4
      %s50 = int_to_ptr.vmem [resolvable:$true] %s49
      %52 = dma.hbm_to_vmem [thread:$0]  %s48, 64, %s50, [#allocation8]
    $region13: #{tpu_custom_call.1} parent=1 // pred_fallthru
      _
    // Predicated region
    $region14: #{tpu_custom_call.1} parent=1 // pred_check
      _
    $region15: #{tpu_custom_call.1} parent=1 // pred_check_branch
      %54 = sbr.rel (0) target = $region17
    $region16: #{tpu_custom_call.1} parent=1 // pred_region
      %56 = vsyncadd [#allocation11], 0
      %s57 = sshll.u32 %s4, 4
      %s58 = int_to_ptr.hbm [resolvable:$true] %s57
      %s59 = sshll.u32 [#allocation10], 4
      %s60 = int_to_ptr.vmem [resolvable:$true] %s59
      %65 = dma.hbm_to_vmem [thread:$0]  %s58, 4096, %s60, [#allocation11], 64, 64, 4
    $region17: #{tpu_custom_call.1} parent=1 // pred_fallthru
      _
    // Predicated region
    $region18: #{tpu_custom_call.1} parent=1 // pred_check
      _
    $region19: #{tpu_custom_call.1} parent=1 // pred_check_branch
      %67 = sbr.rel (0) target = $region21
    $region20: #{tpu_custom_call.1} parent=1 // pred_region
      _
    $region21: #{tpu_custom_call.1} parent=1 // pred_fallthru
      _
    // Predicated region
    $region22: #{tpu_custom_call.1} parent=1 // pred_check
      _
    $region23: #{tpu_custom_call.1} parent=1 // pred_check_branch
      %69 = sbr.rel (0) target = $region25
    $region24: #{tpu_custom_call.1} parent=1 // pred_region
      %71 = dma.done [#allocation5], 1024
    $region25: #{tpu_custom_call.1} parent=1 // pred_fallthru
      _
    // Predicated region
    $region26: #{tpu_custom_call.1} parent=1 // pred_check
      _
    $region27: #{tpu_custom_call.1} parent=1 // pred_check_branch
      %73 = sbr.rel (0) target = $region29
    $region28: #{tpu_custom_call.1} parent=1 // pred_region
      %75 = dma.done [#allocation8], 4096
    $region29: #{tpu_custom_call.1} parent=1 // pred_fallthru
      _
    // Predicated region
    $region30: #{tpu_custom_call.1} parent=1 // pred_check
      _
    $region31: #{tpu_custom_call.1} parent=1 // pred_check_branch
      %77 = sbr.rel (0) target = $region33
    $region32: #{tpu_custom_call.1} parent=1 // pred_region
      %79 = dma.done [#allocation8], 64
    $region33: #{tpu_custom_call.1} parent=1 // pred_fallthru
      _
    // Predicated region
    $region34: #{tpu_custom_call.1} parent=1 // pred_check
      _
    $region35: #{tpu_custom_call.1} parent=1 // pred_check_branch
      %81 = sbr.rel (0) target = $region37
    $region36: #{tpu_custom_call.1} parent=1 // pred_region
      %83 = dma.done [#allocation11], 4096
    $region37: #{tpu_custom_call.1} parent=1 // pred_fallthru
      _
    %v84 = vld [vmem:[#allocation4] sm:$0xff]
    %v85 = vld [vmem:[#allocation4 + $0x8] sm:$0xff]
    %v86 = vld [vmem:[#allocation4 + $0x10] sm:$0xff]
    %v87 = vld [vmem:[#allocation4 + $0x18] sm:$0xff]
    %v88 = vld [vmem:[#allocation4 + $0x20] sm:$0xff]
    %v89 = vld [vmem:[#allocation4 + $0x28] sm:$0xff]
    %v90 = vld [vmem:[#allocation4 + $0x30] sm:$0xff]
    %v91 = vld [vmem:[#allocation4 + $0x38] sm:$0xff]
    %v92 = vpack.c.bf16 %v85, %v84
    %v93 = vpack.c.bf16 %v87, %v86
    %v94 = vpack.c.bf16 %v89, %v88
    %v95 = vpack.c.bf16 %v91, %v90
    %v96 = vld [vmem:[#allocation7] sm:$0xff]
    %v97 = vld [vmem:[#allocation7 + $0x8] sm:$0xff]
    %v98 = vld [vmem:[#allocation7 + $0x10] sm:$0xff]
    %v99 = vld [vmem:[#allocation7 + $0x18] sm:$0xff]
    %v100 = vld [vmem:[#allocation7 + $0x20] sm:$0xff]
    %v101 = vld [vmem:[#allocation7 + $0x28] sm:$0xff]
    %v102 = vld [vmem:[#allocation7 + $0x30] sm:$0xff]
    %v103 = vld [vmem:[#allocation7 + $0x38] sm:$0xff]
    %v104 = vld [vmem:[#allocation7 + $0x40] sm:$0xff]
    %v105 = vld [vmem:[#allocation7 + $0x48] sm:$0xff]
    %v106 = vld [vmem:[#allocation7 + $0x50] sm:$0xff]
    %v107 = vld [vmem:[#allocation7 + $0x58] sm:$0xff]
    %v108 = vld [vmem:[#allocation7 + $0x60] sm:$0xff]
    %v109 = vld [vmem:[#allocation7 + $0x68] sm:$0xff]
    %v110 = vld [vmem:[#allocation7 + $0x70] sm:$0xff]
    %v111 = vld [vmem:[#allocation7 + $0x78] sm:$0xff]
    %v112 = vld [vmem:[#allocation7 + $0x80] sm:$0xff]
    %v113 = vld [vmem:[#allocation7 + $0x88] sm:$0xff]
    %v114 = vld [vmem:[#allocation7 + $0x90] sm:$0xff]
    %v115 = vld [vmem:[#allocation7 + $0x98] sm:$0xff]
    %v116 = vld [vmem:[#allocation7 + $0xa0] sm:$0xff]
    %v117 = vld [vmem:[#allocation7 + $0xa8] sm:$0xff]
    %v118 = vld [vmem:[#allocation7 + $0xb0] sm:$0xff]
    %v119 = vld [vmem:[#allocation7 + $0xb8] sm:$0xff]
    %v120 = vld [vmem:[#allocation7 + $0xc0] sm:$0xff]
    %v121 = vld [vmem:[#allocation7 + $0xc8] sm:$0xff]
    %v122 = vld [vmem:[#allocation7 + $0xd0] sm:$0xff]
    %v123 = vld [vmem:[#allocation7 + $0xd8] sm:$0xff]
    %v124 = vld [vmem:[#allocation7 + $0xe0] sm:$0xff]
    %v125 = vld [vmem:[#allocation7 + $0xe8] sm:$0xff]
    %v126 = vld [vmem:[#allocation7 + $0xf0] sm:$0xff]
    %v127 = vld [vmem:[#allocation7 + $0xf8] sm:$0xff]
    %v128 = vld [vmem:[#allocation9] sm:$0xf]
    %v130 = vperm.slane %v128, 0
    %v131 = vperm.slane %v128, 1
    %v132 = vperm.slane %v128, 2
    %v133 = vperm.slane %v128, 3
    %v170 = vunpack.c.l.b16 %v96
    %v171 = vunpack.c.h.b16 %v96
    %v172 = vunpack.c.l.b16 %v97
    %v173 = vunpack.c.h.b16 %v97
    %v174 = vunpack.c.l.b16 %v98
    %v175 = vunpack.c.h.b16 %v98
    %v176 = vunpack.c.l.b16 %v99
    %v177 = vunpack.c.h.b16 %v99
    %v178 = vunpack.c.l.b16 %v100
    %v179 = vunpack.c.h.b16 %v100
    %v180 = vunpack.c.l.b16 %v101
    %v181 = vunpack.c.h.b16 %v101
    %v182 = vunpack.c.l.b16 %v102
    %v183 = vunpack.c.h.b16 %v102
    %v184 = vunpack.c.l.b16 %v103
    %v185 = vunpack.c.h.b16 %v103
    %v186 = vunpack.c.l.b16 %v104
    %v187 = vunpack.c.h.b16 %v104
    %v188 = vunpack.c.l.b16 %v105
    %v189 = vunpack.c.h.b16 %v105
    %v190 = vunpack.c.l.b16 %v106
    %v191 = vunpack.c.h.b16 %v106
    %v192 = vunpack.c.l.b16 %v107
    %v193 = vunpack.c.h.b16 %v107
    %v194 = vunpack.c.l.b16 %v108
    %v195 = vunpack.c.h.b16 %v108
    %v196 = vunpack.c.l.b16 %v109
    %v197 = vunpack.c.h.b16 %v109
    %v198 = vunpack.c.l.b16 %v110
    %v199 = vunpack.c.h.b16 %v110
    %v200 = vunpack.c.l.b16 %v111
    %v201 = vunpack.c.h.b16 %v111
    %v202 = vunpack.c.l.b16 %v112
    %v203 = vunpack.c.h.b16 %v112
    %v204 = vunpack.c.l.b16 %v113
    %v205 = vunpack.c.h.b16 %v113
    %v206 = vunpack.c.l.b16 %v114
    %v207 = vunpack.c.h.b16 %v114
    %v208 = vunpack.c.l.b16 %v115
    %v209 = vunpack.c.h.b16 %v115
    %v210 = vunpack.c.l.b16 %v116
    %v211 = vunpack.c.h.b16 %v116
    %v212 = vunpack.c.l.b16 %v117
    %v213 = vunpack.c.h.b16 %v117
    %v214 = vunpack.c.l.b16 %v118
    %v215 = vunpack.c.h.b16 %v118
    %v216 = vunpack.c.l.b16 %v119
    %v217 = vunpack.c.h.b16 %v119
    %v218 = vunpack.c.l.b16 %v120
    %v219 = vunpack.c.h.b16 %v120
    %v220 = vunpack.c.l.b16 %v121
    %v221 = vunpack.c.h.b16 %v121
    %v222 = vunpack.c.l.b16 %v122
    %v223 = vunpack.c.h.b16 %v122
    %v224 = vunpack.c.l.b16 %v123
    %v225 = vunpack.c.h.b16 %v123
    %v226 = vunpack.c.l.b16 %v124
    %v227 = vunpack.c.h.b16 %v124
    %v228 = vunpack.c.l.b16 %v125
    %v229 = vunpack.c.h.b16 %v125
    %v230 = vunpack.c.l.b16 %v126
    %v231 = vunpack.c.h.b16 %v126
    %v232 = vunpack.c.l.b16 %v127
    %v233 = vunpack.c.h.b16 %v127
    %v234 = vpack.c.b16 %v174, %v170
    %v235 = vpack.c.b16 %v175, %v171
    %v236 = vpack.c.b16 %v176, %v172
    %v237 = vpack.c.b16 %v177, %v173
    %v238 = vpack.c.b16 %v182, %v178
    %v239 = vpack.c.b16 %v183, %v179
    %v240 = vpack.c.b16 %v184, %v180
    %v241 = vpack.c.b16 %v185, %v181
    %v242 = vpack.c.b16 %v190, %v186
    %v243 = vpack.c.b16 %v191, %v187
    %v244 = vpack.c.b16 %v192, %v188
    %v245 = vpack.c.b16 %v193, %v189
    %v246 = vpack.c.b16 %v198, %v194
    %v247 = vpack.c.b16 %v199, %v195
    %v248 = vpack.c.b16 %v200, %v196
    %v249 = vpack.c.b16 %v201, %v197
    %v250 = vpack.c.b16 %v206, %v202
    %v251 = vpack.c.b16 %v207, %v203
    %v252 = vpack.c.b16 %v208, %v204
    %v253 = vpack.c.b16 %v209, %v205
    %v254 = vpack.c.b16 %v214, %v210
    %v255 = vpack.c.b16 %v215, %v211
    %v256 = vpack.c.b16 %v216, %v212
    %v257 = vpack.c.b16 %v217, %v213
    %v258 = vpack.c.b16 %v222, %v218
    %v259 = vpack.c.b16 %v223, %v219
    %v260 = vpack.c.b16 %v224, %v220
    %v261 = vpack.c.b16 %v225, %v221
    %v262 = vpack.c.b16 %v230, %v226
    %v263 = vpack.c.b16 %v231, %v227
    %v264 = vpack.c.b16 %v232, %v228
    %v265 = vpack.c.b16 %v233, %v229
    %298 = vmatpush.bf16.msra.mxu0 %v262
    %299 = vmatpush.bf16.msra.mxu0 %v258
    %300 = vmatpush.bf16.msra.mxu0 %v254
    %301 = vmatpush.bf16.msra.mxu0 %v250
    %302 = vmatpush.bf16.msra.mxu0 %v246
    %303 = vmatpush.bf16.msra.mxu0 %v242
    %304 = vmatpush.bf16.msra.mxu0 %v238
    %305 = vmatpush.bf16.msra.mxu0 %v234
    %306 = vmatmul.bf16.gmra.mxu0 %v92
    %v307 = vpop.f32.mrf.mxu0
    %v308 = vadd.f32 %v130, %v307
    %v309 = vpop.f32.mrf.mxu0
    %v310 = vadd.f32 %v130, %v309
    %311 = vmatmul.bf16.gmra.mxu0 %v93
    %v312 = vpop.f32.mrf.mxu0
    %v313 = vadd.f32 %v130, %v312
    %v314 = vpop.f32.mrf.mxu0
    %v315 = vadd.f32 %v130, %v314
    %316 = vmatmul.bf16.gmra.mxu0 %v94
    %v317 = vpop.f32.mrf.mxu0
    %v318 = vadd.f32 %v130, %v317
    %v319 = vpop.f32.mrf.mxu0
    %v320 = vadd.f32 %v130, %v319
    %321 = vmatmul.bf16.gmra.mxu0 %v95
    %v322 = vpop.f32.mrf.mxu0
    %v323 = vadd.f32 %v130, %v322
    %v324 = vpop.f32.mrf.mxu0
    %v325 = vadd.f32 %v130, %v324
    %326 = vdwg.mxu0
    %327 = vmatpush.bf16.msra.mxu0 %v263
    %328 = vmatpush.bf16.msra.mxu0 %v259
    %329 = vmatpush.bf16.msra.mxu0 %v255
    %330 = vmatpush.bf16.msra.mxu0 %v251
    %331 = vmatpush.bf16.msra.mxu0 %v247
    %332 = vmatpush.bf16.msra.mxu0 %v243
    %333 = vmatpush.bf16.msra.mxu0 %v239
    %334 = vmatpush.bf16.msra.mxu0 %v235
    %335 = vmatmul.bf16.gmra.mxu0 %v92
    %v336 = vpop.f32.mrf.mxu0
    %v337 = vadd.f32 %v131, %v336
    %v338 = vpop.f32.mrf.mxu0
    %v339 = vadd.f32 %v131, %v338
    %340 = vmatmul.bf16.gmra.mxu0 %v93
    %v341 = vpop.f32.mrf.mxu0
    %v342 = vadd.f32 %v131, %v341
    %v343 = vpop.f32.mrf.mxu0
    %v344 = vadd.f32 %v131, %v343
    %345 = vmatmul.bf16.gmra.mxu0 %v94
    %v346 = vpop.f32.mrf.mxu0
    %v347 = vadd.f32 %v131, %v346
    %v348 = vpop.f32.mrf.mxu0
    %v349 = vadd.f32 %v131, %v348
    %350 = vmatmul.bf16.gmra.mxu0 %v95
    %v351 = vpop.f32.mrf.mxu0
    %v352 = vadd.f32 %v131, %v351
    %v353 = vpop.f32.mrf.mxu0
    %v354 = vadd.f32 %v131, %v353
    %355 = vdwg.mxu0
    %356 = vmatpush.bf16.msra.mxu0 %v264
    %357 = vmatpush.bf16.msra.mxu0 %v260
    %358 = vmatpush.bf16.msra.mxu0 %v256
    %359 = vmatpush.bf16.msra.mxu0 %v252
    %360 = vmatpush.bf16.msra.mxu0 %v248
    %361 = vmatpush.bf16.msra.mxu0 %v244
    %362 = vmatpush.bf16.msra.mxu0 %v240
    %363 = vmatpush.bf16.msra.mxu0 %v236
    %364 = vmatmul.bf16.gmra.mxu0 %v92
    %v365 = vpop.f32.mrf.mxu0
    %v366 = vadd.f32 %v132, %v365
    %v367 = vpop.f32.mrf.mxu0
    %v368 = vadd.f32 %v132, %v367
    %369 = vmatmul.bf16.gmra.mxu0 %v93
    %v370 = vpop.f32.mrf.mxu0
    %v371 = vadd.f32 %v132, %v370
    %v372 = vpop.f32.mrf.mxu0
    %v373 = vadd.f32 %v132, %v372
    %374 = vmatmul.bf16.gmra.mxu0 %v94
    %v375 = vpop.f32.mrf.mxu0
    %v376 = vadd.f32 %v132, %v375
    %v377 = vpop.f32.mrf.mxu0
    %v378 = vadd.f32 %v132, %v377
    %379 = vmatmul.bf16.gmra.mxu0 %v95
    %v380 = vpop.f32.mrf.mxu0
    %v381 = vadd.f32 %v132, %v380
    %v382 = vpop.f32.mrf.mxu0
    %v383 = vadd.f32 %v132, %v382
    %384 = vdwg.mxu0
    %385 = vmatpush.bf16.msra.mxu0 %v265
    %386 = vmatpush.bf16.msra.mxu0 %v261
    %387 = vmatpush.bf16.msra.mxu0 %v257
    %388 = vmatpush.bf16.msra.mxu0 %v253
    %389 = vmatpush.bf16.msra.mxu0 %v249
    %390 = vmatpush.bf16.msra.mxu0 %v245
    %391 = vmatpush.bf16.msra.mxu0 %v241
    %392 = vmatpush.bf16.msra.mxu0 %v237
    %393 = vmatmul.bf16.gmra.mxu0 %v92
    %v394 = vpop.f32.mrf.mxu0
    %v395 = vadd.f32 %v133, %v394
    %v396 = vpop.f32.mrf.mxu0
    %v397 = vadd.f32 %v133, %v396
    %398 = vmatmul.bf16.gmra.mxu0 %v93
    %v399 = vpop.f32.mrf.mxu0
    %v400 = vadd.f32 %v133, %v399
    %v401 = vpop.f32.mrf.mxu0
    %v402 = vadd.f32 %v133, %v401
    %403 = vmatmul.bf16.gmra.mxu0 %v94
    %v404 = vpop.f32.mrf.mxu0
    %v405 = vadd.f32 %v133, %v404
    %v406 = vpop.f32.mrf.mxu0
    %v407 = vadd.f32 %v133, %v406
    %408 = vmatmul.bf16.gmra.mxu0 %v95
    %v409 = vpop.f32.mrf.mxu0
    %v410 = vadd.f32 %v133, %v409
    %v411 = vpop.f32.mrf.mxu0
    %v412 = vadd.f32 %v133, %v411
    %413 = vdwg.mxu0
    %v414 = vmax.f32 %v308, 0.0
    %v415 = vmax.f32 %v337, 0.0
    %v416 = vmax.f32 %v366, 0.0
    %v417 = vmax.f32 %v395, 0.0
    %v418 = vmax.f32 %v310, 0.0
    %v419 = vmax.f32 %v339, 0.0
    %v420 = vmax.f32 %v368, 0.0
    %v421 = vmax.f32 %v397, 0.0
    %v422 = vmax.f32 %v313, 0.0
    %v423 = vmax.f32 %v342, 0.0
    %v424 = vmax.f32 %v371, 0.0
    %v425 = vmax.f32 %v400, 0.0
    %v426 = vmax.f32 %v315, 0.0
    %v427 = vmax.f32 %v344, 0.0
    %v428 = vmax.f32 %v373, 0.0
    %v429 = vmax.f32 %v402, 0.0
    %v430 = vmax.f32 %v318, 0.0
    %v431 = vmax.f32 %v347, 0.0
    %v432 = vmax.f32 %v376, 0.0
    %v433 = vmax.f32 %v405, 0.0
    %v434 = vmax.f32 %v320, 0.0
    %v435 = vmax.f32 %v349, 0.0
    %v436 = vmax.f32 %v378, 0.0
    %v437 = vmax.f32 %v407, 0.0
    %v438 = vmax.f32 %v323, 0.0
    %v439 = vmax.f32 %v352, 0.0
    %v440 = vmax.f32 %v381, 0.0
    %v441 = vmax.f32 %v410, 0.0
    %v442 = vmax.f32 %v325, 0.0
    %v443 = vmax.f32 %v354, 0.0
    %v444 = vmax.f32 %v383, 0.0
    %v445 = vmax.f32 %v412, 0.0
    %v446 = vpack.c.bf16 %v418, %v414
    %v447 = vpack.c.bf16 %v419, %v415
    %v448 = vpack.c.bf16 %v420, %v416
    %v449 = vpack.c.bf16 %v421, %v417
    %v450 = vpack.c.bf16 %v426, %v422
    %v451 = vpack.c.bf16 %v427, %v423
    %v452 = vpack.c.bf16 %v428, %v424
    %v453 = vpack.c.bf16 %v429, %v425
    %v454 = vpack.c.bf16 %v434, %v430
    %v455 = vpack.c.bf16 %v435, %v431
    %v456 = vpack.c.bf16 %v436, %v432
    %v457 = vpack.c.bf16 %v437, %v433
    %v458 = vpack.c.bf16 %v442, %v438
    %v459 = vpack.c.bf16 %v443, %v439
    %v460 = vpack.c.bf16 %v444, %v440
    %v461 = vpack.c.bf16 %v445, %v441
    %v462 = vld [vmem:[#allocation10] sm:$0xf]
    %v463 = vld [vmem:[#allocation10 + $0x4] sm:$0xf]
    %v464 = vld [vmem:[#allocation10 + $0x8] sm:$0xf]
    %v465 = vld [vmem:[#allocation10 + $0xc] sm:$0xf]
    %v466 = vld [vmem:[#allocation10 + $0x10] sm:$0xf]
    %v467 = vld [vmem:[#allocation10 + $0x14] sm:$0xf]
    %v468 = vld [vmem:[#allocation10 + $0x18] sm:$0xf]
    %v469 = vld [vmem:[#allocation10 + $0x1c] sm:$0xf]
    %v470 = vld [vmem:[#allocation10 + $0x20] sm:$0xf]
    %v471 = vld [vmem:[#allocation10 + $0x24] sm:$0xf]
    %v472 = vld [vmem:[#allocation10 + $0x28] sm:$0xf]
    %v473 = vld [vmem:[#allocation10 + $0x2c] sm:$0xf]
    %v474 = vld [vmem:[#allocation10 + $0x30] sm:$0xf]
    %v475 = vld [vmem:[#allocation10 + $0x34] sm:$0xf]
    %v476 = vld [vmem:[#allocation10 + $0x38] sm:$0xf]
    %v477 = vld [vmem:[#allocation10 + $0x3c] sm:$0xf]
    %v478 = vld [vmem:[#allocation10 + $0x40] sm:$0xf]
    %v479 = vld [vmem:[#allocation10 + $0x44] sm:$0xf]
    %v480 = vld [vmem:[#allocation10 + $0x48] sm:$0xf]
    %v481 = vld [vmem:[#allocation10 + $0x4c] sm:$0xf]
    %v482 = vld [vmem:[#allocation10 + $0x50] sm:$0xf]
    %v483 = vld [vmem:[#allocation10 + $0x54] sm:$0xf]
    %v484 = vld [vmem:[#allocation10 + $0x58] sm:$0xf]
    %v485 = vld [vmem:[#allocation10 + $0x5c] sm:$0xf]
    %v486 = vld [vmem:[#allocation10 + $0x60] sm:$0xf]
    %v487 = vld [vmem:[#allocation10 + $0x64] sm:$0xf]
    %v488 = vld [vmem:[#allocation10 + $0x68] sm:$0xf]
    %v489 = vld [vmem:[#allocation10 + $0x6c] sm:$0xf]
    %v490 = vld [vmem:[#allocation10 + $0x70] sm:$0xf]
    %v491 = vld [vmem:[#allocation10 + $0x74] sm:$0xf]
    %v492 = vld [vmem:[#allocation10 + $0x78] sm:$0xf]
    %v493 = vld [vmem:[#allocation10 + $0x7c] sm:$0xf]
    %v494 = vld [vmem:[#allocation10 + $0x80] sm:$0xf]
    %v495 = vld [vmem:[#allocation10 + $0x84] sm:$0xf]
    %v496 = vld [vmem:[#allocation10 + $0x88] sm:$0xf]
    %v497 = vld [vmem:[#allocation10 + $0x8c] sm:$0xf]
    %v498 = vld [vmem:[#allocation10 + $0x90] sm:$0xf]
    %v499 = vld [vmem:[#allocation10 + $0x94] sm:$0xf]
    %v500 = vld [vmem:[#allocation10 + $0x98] sm:$0xf]
    %v501 = vld [vmem:[#allocation10 + $0x9c] sm:$0xf]
    %v502 = vld [vmem:[#allocation10 + $0xa0] sm:$0xf]
    %v503 = vld [vmem:[#allocation10 + $0xa4] sm:$0xf]
    %v504 = vld [vmem:[#allocation10 + $0xa8] sm:$0xf]
    %v505 = vld [vmem:[#allocation10 + $0xac] sm:$0xf]
    %v506 = vld [vmem:[#allocation10 + $0xb0] sm:$0xf]
    %v507 = vld [vmem:[#allocation10 + $0xb4] sm:$0xf]
    %v508 = vld [vmem:[#allocation10 + $0xb8] sm:$0xf]
    %v509 = vld [vmem:[#allocation10 + $0xbc] sm:$0xf]
    %v510 = vld [vmem:[#allocation10 + $0xc0] sm:$0xf]
    %v511 = vld [vmem:[#allocation10 + $0xc4] sm:$0xf]
    %v512 = vld [vmem:[#allocation10 + $0xc8] sm:$0xf]
    %v513 = vld [vmem:[#allocation10 + $0xcc] sm:$0xf]
    %v514 = vld [vmem:[#allocation10 + $0xd0] sm:$0xf]
    %v515 = vld [vmem:[#allocation10 + $0xd4] sm:$0xf]
    %v516 = vld [vmem:[#allocation10 + $0xd8] sm:$0xf]
    %v517 = vld [vmem:[#allocation10 + $0xdc] sm:$0xf]
    %v518 = vld [vmem:[#allocation10 + $0xe0] sm:$0xf]
    %v519 = vld [vmem:[#allocation10 + $0xe4] sm:$0xf]
    %v520 = vld [vmem:[#allocation10 + $0xe8] sm:$0xf]
    %v521 = vld [vmem:[#allocation10 + $0xec] sm:$0xf]
    %v522 = vld [vmem:[#allocation10 + $0xf0] sm:$0xf]
    %v523 = vld [vmem:[#allocation10 + $0xf4] sm:$0xf]
    %v524 = vld [vmem:[#allocation10 + $0xf8] sm:$0xf]
    %v525 = vld [vmem:[#allocation10 + $0xfc] sm:$0xf]
    %v526 = vld [vmem:[%s5] sm:$0x1]
    %v528 = vperm.slane %v526, 0
    %v594 = vunpack.c.l.b16 %v462
    %v595 = vunpack.c.l.b16 %v463
    %v596 = vunpack.c.l.b16 %v464
    %v597 = vunpack.c.l.b16 %v465
    %v598 = vunpack.c.l.b16 %v466
    %v599 = vunpack.c.l.b16 %v467
    %v600 = vunpack.c.l.b16 %v468
    %v601 = vunpack.c.l.b16 %v469
    %v602 = vunpack.c.l.b16 %v470
    %v603 = vunpack.c.l.b16 %v471
    %v604 = vunpack.c.l.b16 %v472
    %v605 = vunpack.c.l.b16 %v473
    %v606 = vunpack.c.l.b16 %v474
    %v607 = vunpack.c.l.b16 %v475
    %v608 = vunpack.c.l.b16 %v476
    %v609 = vunpack.c.l.b16 %v477
    %v610 = vunpack.c.l.b16 %v478
    %v611 = vunpack.c.l.b16 %v479
    %v612 = vunpack.c.l.b16 %v480
    %v613 = vunpack.c.l.b16 %v481
    %v614 = vunpack.c.l.b16 %v482
    %v615 = vunpack.c.l.b16 %v483
    %v616 = vunpack.c.l.b16 %v484
    %v617 = vunpack.c.l.b16 %v485
    %v618 = vunpack.c.l.b16 %v486
    %v619 = vunpack.c.l.b16 %v487
    %v620 = vunpack.c.l.b16 %v488
    %v621 = vunpack.c.l.b16 %v489
    %v622 = vunpack.c.l.b16 %v490
    %v623 = vunpack.c.l.b16 %v491
    %v624 = vunpack.c.l.b16 %v492
    %v625 = vunpack.c.l.b16 %v493
    %v626 = vunpack.c.l.b16 %v494
    %v627 = vunpack.c.l.b16 %v495
    %v628 = vunpack.c.l.b16 %v496
    %v629 = vunpack.c.l.b16 %v497
    %v630 = vunpack.c.l.b16 %v498
    %v631 = vunpack.c.l.b16 %v499
    %v632 = vunpack.c.l.b16 %v500
    %v633 = vunpack.c.l.b16 %v501
    %v634 = vunpack.c.l.b16 %v502
    %v635 = vunpack.c.l.b16 %v503
    %v636 = vunpack.c.l.b16 %v504
    %v637 = vunpack.c.l.b16 %v505
    %v638 = vunpack.c.l.b16 %v506
    %v639 = vunpack.c.l.b16 %v507
    %v640 = vunpack.c.l.b16 %v508
    %v641 = vunpack.c.l.b16 %v509
    %v642 = vunpack.c.l.b16 %v510
    %v643 = vunpack.c.l.b16 %v511
    %v644 = vunpack.c.l.b16 %v512
    %v645 = vunpack.c.l.b16 %v513
    %v646 = vunpack.c.l.b16 %v514
    %v647 = vunpack.c.l.b16 %v515
    %v648 = vunpack.c.l.b16 %v516
    %v649 = vunpack.c.l.b16 %v517
    %v650 = vunpack.c.l.b16 %v518
    %v651 = vunpack.c.l.b16 %v519
    %v652 = vunpack.c.l.b16 %v520
    %v653 = vunpack.c.l.b16 %v521
    %v654 = vunpack.c.l.b16 %v522
    %v655 = vunpack.c.l.b16 %v523
    %v656 = vunpack.c.l.b16 %v524
    %v657 = vunpack.c.l.b16 %v525
    %v658 = vpack.c.b16 %v595, %v594
    %v659 = vpack.c.b16 %v597, %v596
    %v660 = vpack.c.b16 %v599, %v598
    %v661 = vpack.c.b16 %v601, %v600
    %v662 = vpack.c.b16 %v603, %v602
    %v663 = vpack.c.b16 %v605, %v604
    %v664 = vpack.c.b16 %v607, %v606
    %v665 = vpack.c.b16 %v609, %v608
    %v666 = vpack.c.b16 %v611, %v610
    %v667 = vpack.c.b16 %v613, %v612
    %v668 = vpack.c.b16 %v615, %v614
    %v669 = vpack.c.b16 %v617, %v616
    %v670 = vpack.c.b16 %v619, %v618
    %v671 = vpack.c.b16 %v621, %v620
    %v672 = vpack.c.b16 %v623, %v622
    %v673 = vpack.c.b16 %v625, %v624
    %v674 = vpack.c.b16 %v627, %v626
    %v675 = vpack.c.b16 %v629, %v628
    %v676 = vpack.c.b16 %v631, %v630
    %v677 = vpack.c.b16 %v633, %v632
    %v678 = vpack.c.b16 %v635, %v634
    %v679 = vpack.c.b16 %v637, %v636
    %v680 = vpack.c.b16 %v639, %v638
    %v681 = vpack.c.b16 %v641, %v640
    %v682 = vpack.c.b16 %v643, %v642
    %v683 = vpack.c.b16 %v645, %v644
    %v684 = vpack.c.b16 %v647, %v646
    %v685 = vpack.c.b16 %v649, %v648
    %v686 = vpack.c.b16 %v651, %v650
    %v687 = vpack.c.b16 %v653, %v652
    %v688 = vpack.c.b16 %v655, %v654
    %v689 = vpack.c.b16 %v657, %v656
    %722 = vmatpush.bf16.msra.mxu0 %v665
    %723 = vmatpush.bf16.msra.mxu0 %v664
    %724 = vmatpush.bf16.msra.mxu0 %v663
    %725 = vmatpush.bf16.msra.mxu0 %v662
    %726 = vmatpush.bf16.msra.mxu0 %v661
    %727 = vmatpush.bf16.msra.mxu0 %v660
    %728 = vmatpush.bf16.msra.mxu0 %v659
    %729 = vmatpush.bf16.msra.mxu0 %v658
    %730 = vmatmul.bf16.gmra.mxu0 %v446
    %v731 = vpop.f32.mrf.mxu0
    %v732 = vadd.f32 %v528, %v731
    %v733 = vpop.f32.mrf.mxu0
    %v734 = vadd.f32 %v528, %v733
    %735 = vmatmul.bf16.gmra.mxu0 %v450
    %v736 = vpop.f32.mrf.mxu0
    %v737 = vadd.f32 %v528, %v736
    %v738 = vpop.f32.mrf.mxu0
    %v739 = vadd.f32 %v528, %v738
    %740 = vmatmul.bf16.gmra.mxu0 %v454
    %v741 = vpop.f32.mrf.mxu0
    %v742 = vadd.f32 %v528, %v741
    %v743 = vpop.f32.mrf.mxu0
    %v744 = vadd.f32 %v528, %v743
    %745 = vmatmul.bf16.gmra.mxu0 %v458
    %v746 = vpop.f32.mrf.mxu0
    %v747 = vadd.f32 %v528, %v746
    %v748 = vpop.f32.mrf.mxu0
    %v749 = vadd.f32 %v528, %v748
    %750 = vdwg.mxu0
    %751 = vmatpush.bf16.msra.mxu0 %v673
    %752 = vmatpush.bf16.msra.mxu0 %v672
    %753 = vmatpush.bf16.msra.mxu0 %v671
    %754 = vmatpush.bf16.msra.mxu0 %v670
    %755 = vmatpush.bf16.msra.mxu0 %v669
    %756 = vmatpush.bf16.msra.mxu0 %v668
    %757 = vmatpush.bf16.msra.mxu0 %v667
    %758 = vmatpush.bf16.msra.mxu0 %v666
    %759 = vmatmul.bf16.gmra.mxu0 %v447
    %v760 = vpop.f32.mrf.mxu0
    %v761 = vadd.f32 %v732, %v760
    %v762 = vpop.f32.mrf.mxu0
    %v763 = vadd.f32 %v734, %v762
    %764 = vmatmul.bf16.gmra.mxu0 %v451
    %v765 = vpop.f32.mrf.mxu0
    %v766 = vadd.f32 %v737, %v765
    %v767 = vpop.f32.mrf.mxu0
    %v768 = vadd.f32 %v739, %v767
    %769 = vmatmul.bf16.gmra.mxu0 %v455
    %v770 = vpop.f32.mrf.mxu0
    %v771 = vadd.f32 %v742, %v770
    %v772 = vpop.f32.mrf.mxu0
    %v773 = vadd.f32 %v744, %v772
    %774 = vmatmul.bf16.gmra.mxu0 %v459
    %v775 = vpop.f32.mrf.mxu0
    %v776 = vadd.f32 %v747, %v775
    %v777 = vpop.f32.mrf.mxu0
    %v778 = vadd.f32 %v749, %v777
    %779 = vdwg.mxu0
    %780 = vmatpush.bf16.msra.mxu0 %v681
    %781 = vmatpush.bf16.msra.mxu0 %v680
    %782 = vmatpush.bf16.msra.mxu0 %v679
    %783 = vmatpush.bf16.msra.mxu0 %v678
    %784 = vmatpush.bf16.msra.mxu0 %v677
    %785 = vmatpush.bf16.msra.mxu0 %v676
    %786 = vmatpush.bf16.msra.mxu0 %v675
    %787 = vmatpush.bf16.msra.mxu0 %v674
    %788 = vmatmul.bf16.gmra.mxu0 %v448
    %v789 = vpop.f32.mrf.mxu0
    %v790 = vadd.f32 %v761, %v789
    %v791 = vpop.f32.mrf.mxu0
    %v792 = vadd.f32 %v763, %v791
    %793 = vmatmul.bf16.gmra.mxu0 %v452
    %v794 = vpop.f32.mrf.mxu0
    %v795 = vadd.f32 %v766, %v794
    %v796 = vpop.f32.mrf.mxu0
    %v797 = vadd.f32 %v768, %v796
    %798 = vmatmul.bf16.gmra.mxu0 %v456
    %v799 = vpop.f32.mrf.mxu0
    %v800 = vadd.f32 %v771, %v799
    %v801 = vpop.f32.mrf.mxu0
    %v802 = vadd.f32 %v773, %v801
    %803 = vmatmul.bf16.gmra.mxu0 %v460
    %v804 = vpop.f32.mrf.mxu0
    %v805 = vadd.f32 %v776, %v804
    %v806 = vpop.f32.mrf.mxu0
    %v807 = vadd.f32 %v778, %v806
    %808 = vdwg.mxu0
    %809 = vmatpush.bf16.msra.mxu0 %v689
    %810 = vmatpush.bf16.msra.mxu0 %v688
    %811 = vmatpush.bf16.msra.mxu0 %v687
    %812 = vmatpush.bf16.msra.mxu0 %v686
    %813 = vmatpush.bf16.msra.mxu0 %v685
    %814 = vmatpush.bf16.msra.mxu0 %v684
    %815 = vmatpush.bf16.msra.mxu0 %v683
    %816 = vmatpush.bf16.msra.mxu0 %v682
    %817 = vmatmul.bf16.gmra.mxu0 %v449
    %v818 = vpop.f32.mrf.mxu0
    %v819 = vadd.f32 %v790, %v818
    %v820 = vpop.f32.mrf.mxu0
    %v821 = vadd.f32 %v792, %v820
    %822 = vmatmul.bf16.gmra.mxu0 %v453
    %v823 = vpop.f32.mrf.mxu0
    %v824 = vadd.f32 %v795, %v823
    %v825 = vpop.f32.mrf.mxu0
    %v826 = vadd.f32 %v797, %v825
    %827 = vmatmul.bf16.gmra.mxu0 %v457
    %v828 = vpop.f32.mrf.mxu0
    %v829 = vadd.f32 %v800, %v828
    %v830 = vpop.f32.mrf.mxu0
    %v831 = vadd.f32 %v802, %v830
    %832 = vmatmul.bf16.gmra.mxu0 %v461
    %v833 = vpop.f32.mrf.mxu0
    %v834 = vadd.f32 %v805, %v833
    %v835 = vpop.f32.mrf.mxu0
    %v836 = vadd.f32 %v807, %v835
    %837 = vdwg.mxu0
    %838 = vst [vmem:[#allocation12] sm:$0xff] %v819
    %839 = vst [vmem:[#allocation12 + $0x8] sm:$0xff] %v821
    %840 = vst [vmem:[#allocation12 + $0x10] sm:$0xff] %v824
    %841 = vst [vmem:[#allocation12 + $0x18] sm:$0xff] %v826
    %842 = vst [vmem:[#allocation12 + $0x20] sm:$0xff] %v829
    %843 = vst [vmem:[#allocation12 + $0x28] sm:$0xff] %v831
    %844 = vst [vmem:[#allocation12 + $0x30] sm:$0xff] %v834
    %845 = vst [vmem:[#allocation12 + $0x38] sm:$0xff] %v836
    // Predicated region
    $region38: #{tpu_custom_call.1} parent=1 // pred_check
      _
    $region39: #{tpu_custom_call.1} parent=1 // pred_check_branch
      %847 = sbr.rel (0) target = $region41
    $region40: #{tpu_custom_call.1} parent=1 // pred_region
      %849 = vsyncadd [#allocation6], 0
      %s850 = sshll.u32 [#allocation12], 4
      %s851 = int_to_ptr.vmem [resolvable:$true] %s850
      %s852 = sshll.u32 %s6, 4
      %s853 = int_to_ptr.hbm [resolvable:$true] %s852
      %858 = dma.vmem_to_hbm [thread:$0]  %s851, 1024, %s853, [#allocation6], 128, 128, 8
    $region41: #{tpu_custom_call.1} parent=1 // pred_fallthru
      _
    // Predicated region
    $region42: #{tpu_custom_call.1} parent=1 // pred_check
      _
    $region43: #{tpu_custom_call.1} parent=1 // pred_check_branch
      %860 = sbr.rel (0) target = $region45
    $region44: #{tpu_custom_call.1} parent=1 // pred_region
      %862 = dma.done [#allocation6], 1024
    $region45: #{tpu_custom_call.1} parent=1 // pred_fallthru
      _
    %863 = vsyncpa [#allocation5], 1
    %864 = vsyncpa [#allocation8], 1
    %865 = vsyncpa [#allocation11], 1
    %866 = vsyncpa [#allocation6], 1

</llo_original>
